<compile_context>
chip_gen: v5e
topology: v5e:2x2
jax: 0.10.0
libtpu: 0.0.40
codegen_flags: <defaults>
</compile_context>

<pallas_src>
import functools

import jax
import jax.numpy as jnp
from jax.experimental import pallas as pl
from jax.experimental.pallas import tpu as pltpu


def _round_up(n, m):
    return ((n + m - 1) // m) * m


def _cdiv(a, b):
    return (a + b - 1) // b


def _layer_dims(dim_num, layer_num):
    in_dims, out_dims = [], []
    for i in range(layer_num):
        in_dims.append(dim_num // (2 ** i))
        out_dims.append(1 if i + 1 == layer_num else dim_num // (2 ** (i + 1)))
    return in_dims, out_dims


def _packing_layout(dim_num, layer_num):
    """Static layout of the bf16 W^T slab and the f32 aux (bias + last-W) buffer."""
    in_dims, out_dims = _layer_dims(dim_num, layer_num)
    n_hidden = layer_num - 1
    woffs, off = [], 0
    for i in range(n_hidden):
        woffs.append(off)
        off += _round_up(out_dims[i], 16)            # bf16 sublane packing: 16-row blocks
    w_rows = max(off, 16)
    w_cols = _round_up(max(in_dims[:n_hidden], default=1), 128)   # full-lane weight rows
    d_last = in_dims[layer_num - 1]
    aux_rows = _round_up(max(max(out_dims), d_last), 8)
    aux_cols = layer_num + 1                         # cols 0..L-1: biases; col L: last W column
    return in_dims, out_dims, woffs, (w_rows, w_cols), d_last, (aux_rows, aux_cols)


def init_mlp_params(key, dim_num, layer_num):
    """Deterministic init mirroring nn.Linear default U(-1/sqrt(in), 1/sqrt(in)).

    Weights are stored already transposed to [in_dim, out_dim]."""
    in_dims, out_dims = _layer_dims(dim_num, layer_num)
    params = []
    for i in range(layer_num):
        key, kw, kb = jax.random.split(key, 3)
        bound = 1.0 / float(in_dims[i]) ** 0.5
        w = jax.random.uniform(kw, (in_dims[i], out_dims[i]), jnp.float32, -bound, bound)
        b = jax.random.uniform(kb, (out_dims[i],), jnp.float32, -bound, bound)
        params.append((w, b))
    return params


def pack_params(params, dim_num, layer_num):
    """One-time (model-load) packing — NOT in the per-call hot path.

    Returns:
      w_slab: bf16 [w_rows, w_cols] — hidden-layer W^T blocks, 16-row aligned.
      aux:    f32  [aux_rows, L+1]  — col i: bias of layer i; col L: last-layer W column.
    """
    in_dims, out_dims, woffs, w_shape, d_last, aux_shape = _packing_layout(dim_num, layer_num)
    w_slab = jnp.zeros(w_shape, jnp.float32)
    for i in range(layer_num - 1):
        w, _ = params[i]                                              # [in, out]
        w_slab = w_slab.at[woffs[i]:woffs[i] + out_dims[i], 0:in_dims[i]].set(w.T)
    w_slab = w_slab.astype(jnp.bfloat16)                              # pre-cast once

    aux = jnp.zeros(aux_shape, jnp.float32)
    for i in range(layer_num):
        _, b = params[i]
        aux = aux.at[0:out_dims[i], i].set(b)
    w_last, _ = params[layer_num - 1]                                 # [d_last, 1]
    aux = aux.at[0:d_last, layer_num].set(w_last[:, 0])
    return w_slab, aux


def _choose_tiling(batch, max_tile=4096):
    """Pad the batch and split into 1 tile (tiny batches) or an even number of big
    tiles so both v7x TensorCores get work; single-TC chips pay ~0.35us extra."""
    if batch <= 384:
        num_tiles = 1
    else:
        num_tiles = max(2, 2 * _cdiv(batch, 2 * max_tile))
    padded = _round_up(batch, 128 * num_tiles)       # keeps tile_b a multiple of 128 (lanes)
    return padded, num_tiles, padded // num_tiles


def _make_kernel(layer_num, in_dims, out_dims, woffs):
    n_hidden = layer_num - 1
    d_last = in_dims[layer_num - 1]

    def kernel(x_ref, w_ref, aux_ref, o_ref):
        h = x_ref[...]                                                   # bf16 [d, TILE_B]

        # Hidden layers: bf16 MXU matmul (W^T @ h), f32 bias + ReLU, lane-dense.
        for i in range(n_hidden):
            w_t = w_ref[woffs[i]:woffs[i] + out_dims[i], 0:in_dims[i]]   # bf16 [out, in]
            b = aux_ref[0:out_dims[i], i:i + 1]                          # f32  [out, 1]
            acc = jnp.dot(w_t, h, preferred_element_type=jnp.float32) + b
            acc = jnp.maximum(acc, 0.0)          # ReLU (Dropout2d == identity at inference)
            h = acc.astype(jnp.bfloat16)                                 # bf16 [out, TILE_B]

        # Final layer (out_dim == 1): f32 VPU multiply + sublane reduce -> [1, TILE_B].
        w_col = aux_ref[0:d_last, layer_num:layer_num + 1]               # f32 [d_last, 1]
        b_last = aux_ref[0:1, layer_num - 1:layer_num]                   # f32 [1, 1]
        row = jnp.sum(h.astype(jnp.float32) * w_col, axis=0, keepdims=True) + b_last
        o_ref[...] = row[None]                                           # [1, 1, TILE_B]

    return kernel


@functools.partial(jax.jit, static_argnames=("layer_num",))
def mlp_forward(x_num, w_slab, aux, layer_num):
    """x_num: [batch, dim_num] (any float dtype). Returns f32 [batch, 1]."""
    batch, dim_num = x_num.shape
    in_dims, out_dims, woffs, w_shape, d_last, aux_shape = _packing_layout(dim_num, layer_num)
    if tuple(w_slab.shape) != w_shape or tuple(aux.shape) != aux_shape:
        raise ValueError(
            f"packed parameter shapes {tuple(w_slab.shape)}/{tuple(aux.shape)} do not match "
            f"layout {w_shape}/{aux_shape} for dim_num={dim_num}, layer_num={layer_num}")

    padded, num_tiles, tile_b = _choose_tiling(batch)
    x = x_num.astype(jnp.bfloat16)                   # no-op if caller supplies bf16
    if padded != batch:
        x = jnp.pad(x, ((0, padded - batch), (0, 0)))
    x_t = x.T                                        # feature-major: [dim_num, padded]

    kernel = _make_kernel(layer_num, in_dims, out_dims, woffs)

    out3 = pl.pallas_call(
        kernel,
        out_shape=jax.ShapeDtypeStruct((num_tiles, 1, tile_b), jnp.float32),
        grid=(num_tiles,),
        in_specs=[
            pl.BlockSpec((dim_num, tile_b), lambda i: (0, i)),   # batch on the 128-lane axis
            pl.BlockSpec(w_shape, lambda i: (0, 0)),             # params: fetched once, resident
            pl.BlockSpec(aux_shape, lambda i: (0, 0)),
        ],
        out_specs=pl.BlockSpec((1, 1, tile_b), lambda i: (i, 0, 0)),   # lane-dense output row
        compiler_params=pltpu.CompilerParams(
            dimension_semantics=("parallel",)),                  # megacore sharding on v7x
    )(x_t, w_slab, aux)

    return out3.reshape(padded, 1)[:batch]


def mlpnet_apply(x_dict, packed, layer_num):
    """Mirrors MLPNet.forward: takes a dict with key 'num' and pre-packed params."""
    w_slab, aux = packed
    return mlp_forward(x_dict["num"], w_slab, aux, layer_num=layer_num)


def _reference(x_bf16, params, layer_num):
    """Pure-JAX reference mirroring the kernel's dtype path."""
    h = x_bf16
    for i in range(layer_num - 1):
        w, b = params[i]
        acc = jnp.dot(h, w.astype(jnp.bfloat16), preferred_element_type=jnp.float32) + b
        h = jnp.maximum(acc, 0.0).astype(jnp.bfloat16)
    w, b = params[layer_num - 1]
    return h.astype(jnp.float32) @ w + b


if __name__ == "__main__":
    dim_num = 32
    layer_num = 3          # 32 -> 16 -> 8 -> 1
    drop_out_rate = 0.1    # unused at inference (Dropout2d == identity)
    batch = 1000           # pads to 1024 -> grid=(2,), tile_b=512

    key = jax.random.PRNGKey(0)
    key, kx = jax.random.split(key)
    x = jax.random.normal(kx, (batch, dim_num), jnp.float32).astype(jnp.bfloat16)

    params = init_mlp_params(key, dim_num, layer_num)
    packed = pack_params(params, dim_num, layer_num)   # one-time, at model load

    out = mlpnet_apply({"num": x}, packed, layer_num)
    out = jax.block_until_ready(out)

    assert out.shape == (batch, 1), out.shape
    assert out.dtype == jnp.float32, out.dtype

    ref = _reference(x, params, layer_num)
    assert jnp.allclose(out, ref, atol=2e-3, rtol=2e-3), float(jnp.max(jnp.abs(out - ref)))

    print("KERNEL_OK")
</pallas_src>

<mosaic_0001>
module attributes {stable_mosaic.version = 11 : i64} {
  func.func @kernel(%arg0: i32, %arg1: memref<32x512xbf16, #tpu.memory_space<vmem>>, %arg2: memref<32x128xbf16, #tpu.memory_space<vmem>>, %arg3: memref<16x4xf32, #tpu.memory_space<vmem>>, %arg4: memref<1x1x512xf32, #tpu.memory_space<vmem>>) attributes {dimension_semantics = [#tpu.dimension_semantics<parallel>], iteration_bounds = array<i64: 2>, scalar_prefetch = 0 : i64, scratch_operands = 0 : i64, tpu.core_type = #tpu.core_type<tc>, window_params = [{transform_indices = @transform_0, window_bounds = array<i64: 32, 512>}, {pipeline_mode = #tpu.pipeline_mode<synchronous>, transform_indices = @transform_1, window_bounds = array<i64: 32, 128>}, {pipeline_mode = #tpu.pipeline_mode<synchronous>, transform_indices = @transform_2, window_bounds = array<i64: 16, 4>}, {transform_indices = @transform_3, window_bounds = array<i64: 1, 1, 512>}]} {
    %c0 = arith.constant 0 : index
    %c0_0 = arith.constant 0 : index
    %0 = vector.load %arg1[%c0, %c0_0] : memref<32x512xbf16, #tpu.memory_space<vmem>>, vector<32x512xbf16>
    %c0_1 = arith.constant 0 : index
    %c0_2 = arith.constant 0 : index
    %1 = vector.load %arg2[%c0_1, %c0_2] : memref<32x128xbf16, #tpu.memory_space<vmem>>, vector<16x32xbf16>
    %c0_3 = arith.constant 0 : index
    %c0_4 = arith.constant 0 : index
    %2 = vector.load %arg3[%c0_3, %c0_4] : memref<16x4xf32, #tpu.memory_space<vmem>>, vector<16x1xf32>
    %cst = arith.constant dense<0.000000e+00> : vector<16x512xf32>
    %3 = tpu.matmul %1, %0, %cst {dimension_numbers = #tpu.dot_dimension_numbers<[1], [0], [0], [1], [0, 0, 1, 1], [], []>} : vector<16x32xbf16>, vector<32x512xbf16>, vector<16x512xf32> -> vector<16x512xf32>
    %4 = vector.broadcast %2 : vector<16x1xf32> to vector<16x512xf32>
    %5 = arith.addf %3, %4 : vector<16x512xf32>
    %cst_5 = arith.constant 0.000000e+00 : f32
    %6 = vector.broadcast %cst_5 : f32 to vector<16x512xf32>
    %7 = arith.maximumf %5, %6 : vector<16x512xf32>
    %8 = arith.truncf %7 : vector<16x512xf32> to vector<16x512xbf16>
    %c16 = arith.constant 16 : index
    %c0_6 = arith.constant 0 : index
    %9 = vector.load %arg2[%c16, %c0_6] : memref<32x128xbf16, #tpu.memory_space<vmem>>, vector<8x16xbf16>
    %c0_7 = arith.constant 0 : index
    %c1 = arith.constant 1 : index
    %10 = vector.load %arg3[%c0_7, %c1] : memref<16x4xf32, #tpu.memory_space<vmem>>, vector<8x1xf32>
    %cst_8 = arith.constant dense<0.000000e+00> : vector<8x512xf32>
    %11 = tpu.matmul %9, %8, %cst_8 {dimension_numbers = #tpu.dot_dimension_numbers<[1], [0], [0], [1], [0, 0, 1, 1], [], []>} : vector<8x16xbf16>, vector<16x512xbf16>, vector<8x512xf32> -> vector<8x512xf32>
    %12 = vector.broadcast %10 : vector<8x1xf32> to vector<8x512xf32>
    %13 = arith.addf %11, %12 : vector<8x512xf32>
    %cst_9 = arith.constant 0.000000e+00 : f32
    %14 = vector.broadcast %cst_9 : f32 to vector<8x512xf32>
    %15 = arith.maximumf %13, %14 : vector<8x512xf32>
    %16 = arith.truncf %15 : vector<8x512xf32> to vector<8x512xbf16>
    %c0_10 = arith.constant 0 : index
    %c3 = arith.constant 3 : index
    %17 = vector.load %arg3[%c0_10, %c3] : memref<16x4xf32, #tpu.memory_space<vmem>>, vector<8x1xf32>
    %c0_11 = arith.constant 0 : index
    %c2 = arith.constant 2 : index
    %18 = vector.load %arg3[%c0_11, %c2] : memref<16x4xf32, #tpu.memory_space<vmem>>, vector<1x1xf32>
    %19 = arith.extf %16 : vector<8x512xbf16> to vector<8x512xf32>
    %20 = vector.broadcast %17 : vector<8x1xf32> to vector<8x512xf32>
    %21 = arith.mulf %19, %20 : vector<8x512xf32>
    %cst_12 = arith.constant dense<0.000000e+00> : vector<512xf32>
    %22 = vector.multi_reduction <add>, %21, %cst_12 [0] : vector<8x512xf32> to vector<512xf32>
    %23 = vector.shape_cast %22 : vector<512xf32> to vector<1x512xf32>
    %24 = vector.broadcast %18 : vector<1x1xf32> to vector<1x512xf32>
    %25 = arith.addf %23, %24 : vector<1x512xf32>
    %26 = vector.shape_cast %25 : vector<1x512xf32> to vector<1x1x512xf32>
    %c0_13 = arith.constant 0 : index
    %c0_14 = arith.constant 0 : index
    %c0_15 = arith.constant 0 : index
    %27 = vector.load %arg4[%c0_13, %c0_14, %c0_15] : memref<1x1x512xf32, #tpu.memory_space<vmem>>, vector<1x1x512xf32>
    tpu.vector_store %arg4[%c0_13, %c0_14, %c0_15], %26 {strides = array<i32>} : memref<1x1x512xf32, #tpu.memory_space<vmem>>, vector<1x1x512xf32>,
    return
  }
  func.func @transform_0(%arg0: i32) -> (i32, i32) {
    %c0_i32 = arith.constant 0 : i32
    %c0_i32_0 = arith.constant 0 : i32
    return %c0_i32, %arg0 : i32, i32
  }
  func.func @transform_1(%arg0: i32) -> (i32, i32) {
    %c0_i32 = arith.constant 0 : i32
    %c0_i32_0 = arith.constant 0 : i32
    %c0_i32_1 = arith.constant 0 : i32
    return %c0_i32, %c0_i32_0 : i32, i32
  }
  func.func @transform_2(%arg0: i32) -> (i32, i32) {
    %c0_i32 = arith.constant 0 : i32
    %c0_i32_0 = arith.constant 0 : i32
    %c0_i32_1 = arith.constant 0 : i32
    return %c0_i32, %c0_i32_0 : i32, i32
  }
  func.func @transform_3(%arg0: i32) -> (i32, i32, i32) {
    %c0_i32 = arith.constant 0 : i32
    %c0_i32_0 = arith.constant 0 : i32
    %c0_i32_1 = arith.constant 0 : i32
    return %arg0, %c0_i32, %c0_i32_0 : i32, i32, i32
  }
}

</mosaic_0001>

<llo_original>
// kernel: mlp_forward.1
$region0: #{mlp_forward.1}
  #allocation0 [shape = 'u32[]', space=smem, size = 0x4, offset = 0x4, fixed_abs, tag = 'smem constant byte address 0x4 - core index']
  #allocation1 [shape = 'u32[72,128]{1,0:T(1,128)}', space=vmem, size = 0x9000, scoped, tag = 'internal scratch']
  %s0 = inlined_call_operand.vmem [shape: bf16[32,1024], index: 0, kind: input, shape index: {}]
  %s1 = inlined_call_operand.vmem [shape: bf16[32,128], index: 1, kind: input, shape index: {}]
  %s2 = inlined_call_operand.vmem [shape: f32[16,4], index: 2, kind: input, shape index: {}]
  %s3 = inlined_call_operand.hbm [shape: f32[2,1,512], index: 3, kind: output, shape index: {}]
  %s4 = sld [smem:[#allocation0]]
  $region68: #{mlp_forward.1} parent=0
    _
  %s6 = ssub.s32 1, %s4
  %s7 = scalar_select 0, %s6, %s4
  $region1: #{mlp_forward.1} parent=0
    #allocation2 [shape = 'u8[65536]{0}', space=vmem, size = 0x10000, scoped, tag = 'input window, operand 0']
    #allocation3 [shape = 'u8[4096]{0}', space=vmem, size = 0x1000, scoped, tag = 'output window, operand 0']
    #allocation4 [shape = 's32[2]{0}', space=sflag, size = 0x8, scoped, tag = 'scoped memory for mlp_forward.1']
    %8 = vsyncpa [#allocation4], 0
    %s9 = scalar_lea.sflag [#allocation4], 1
    %10 = vsyncpa %s9, 0
    loop: start=0, step=1, limit=4
    $region2: #{mlp_forward.1} parent=1 // loop_pre_header
      _
    $region3: #{mlp_forward.1} parent=1 // loop_header
      %s12 = sphi 0, %s16
      %p13 = scmp.ge.s32.totalorder %s12, 4
      %s22 = sphi 0, %s24
      %s25 = sphi 0, %s22
      %s26 = sphi 0, %s25
      %s42 = sphi 0, %s26
      %s46 = sphi 0, %s46
      %s48 = sphi 0, %s46
      %s49 = sphi 0, %s48
      %s63 = sphi 0, %s49
      %s67 = sphi 0, %s67
      %s69 = sphi 0, %s67
      %s70 = sphi 0, %s69
      %s84 = sphi 0, %s70
      %s90 = sphi 0, %s92
      %s93 = sphi 0, %s90
      %s94 = sphi 0, %s93
      %s110 = sphi 0, %s94
    $region4: #{mlp_forward.1} parent=1 // loop_header_branch
      %15 = sbr.rel (%p13) target = $region8
    $region5: #{mlp_forward.1} parent=1 // loop_body
      %s17 = ssub.s32 %s12, 1
      %s18 = ssub.s32 %s12, 2
      %s19 = sadd.s32 %s12, 1
      %s20 = ssub.s32 %s12, %s19
      %p21 = scmp.eq.s32.totalorder %s20, 0
      %s23 = sadd.s32 %s22, 1
      %s24 = scalar_select %p21, %s22, %s23
      %p27 = pneg %p21
      %p28 = scmp.eq.s32.totalorder %s12, 1
      %p29 = por %p27, %p28
      %p30 = scmp.ne.s32.totalorder %s22, %s25
      %p31 = scmp.eq.s32.totalorder %s12, 0
      %p32 = por %p30, %p31
      %p33 = scmp.ne.s32.totalorder %s22, %s25
      %p34 = scmp.eq.s32.totalorder %s17, 1
      %p35 = por %p33, %p34
      %p36 = scmp.ne.s32.totalorder %s25, %s26
      %p37 = scmp.eq.s32.totalorder %s17, 0
      %p38 = por %p36, %p37
      %p39 = scmp.ne.s32.totalorder %s25, %s26
      %p40 = scmp.eq.s32.totalorder %s18, 1
      %p41 = por %p39, %p40
      %p43 = scmp.ne.s32.totalorder %s26, %s42
      %p44 = scmp.eq.s32.totalorder %s18, 0
      %p45 = por %p43, %p44
      %s47 = sadd.s32 %s46, 1
      %p50 = scmp.eq.s32.totalorder %s12, 1
      %p51 = scmp.ne.s32.totalorder %s46, %s48
      %p52 = scmp.eq.s32.totalorder %s12, 0
      %p53 = por %p51, %p52
      %p54 = scmp.ne.s32.totalorder %s46, %s48
      %p55 = scmp.eq.s32.totalorder %s17, 1
      %p56 = por %p54, %p55
      %p57 = scmp.ne.s32.totalorder %s48, %s49
      %p58 = scmp.eq.s32.totalorder %s17, 0
      %p59 = por %p57, %p58
      %p60 = scmp.ne.s32.totalorder %s48, %s49
      %p61 = scmp.eq.s32.totalorder %s18, 1
      %p62 = por %p60, %p61
      %p64 = scmp.ne.s32.totalorder %s49, %s63
      %p65 = scmp.eq.s32.totalorder %s18, 0
      %p66 = por %p64, %p65
      %s68 = sadd.s32 %s67, 1
      %p71 = scmp.eq.s32.totalorder %s12, 1
      %p72 = scmp.ne.s32.totalorder %s67, %s69
      %p73 = scmp.eq.s32.totalorder %s12, 0
      %p74 = por %p72, %p73
      %p75 = scmp.ne.s32.totalorder %s67, %s69
      %p76 = scmp.eq.s32.totalorder %s17, 1
      %p77 = por %p75, %p76
      %p78 = scmp.ne.s32.totalorder %s69, %s70
      %p79 = scmp.eq.s32.totalorder %s17, 0
      %p80 = por %p78, %p79
      %p81 = scmp.ne.s32.totalorder %s69, %s70
      %p82 = scmp.eq.s32.totalorder %s18, 1
      %p83 = por %p81, %p82
      %p85 = scmp.ne.s32.totalorder %s70, %s84
      %p86 = scmp.eq.s32.totalorder %s18, 0
      %p87 = por %p85, %p86
      %s88 = ssub.s32 %s12, %s19
      %p89 = scmp.eq.s32.totalorder %s88, 0
      %s91 = sadd.s32 %s90, 1
      %s92 = scalar_select %p89, %s90, %s91
      %p95 = pneg %p89
      %p96 = scmp.eq.s32.totalorder %s12, 1
      %p97 = por %p95, %p96
      %p98 = scmp.ne.s32.totalorder %s90, %s93
      %p99 = scmp.eq.s32.totalorder %s12, 0
      %p100 = por %p98, %p99
      %p101 = scmp.ne.s32.totalorder %s90, %s93
      %p102 = scmp.eq.s32.totalorder %s17, 1
      %p103 = por %p101, %p102
      %p104 = scmp.ne.s32.totalorder %s93, %s94
      %p105 = scmp.eq.s32.totalorder %s17, 0
      %p106 = por %p104, %p105
      %p107 = scmp.ne.s32.totalorder %s93, %s94
      %p108 = scmp.eq.s32.totalorder %s18, 1
      %p109 = por %p107, %p108
      %p111 = scmp.ne.s32.totalorder %s94, %s110
      %p112 = scmp.eq.s32.totalorder %s18, 0
      %p113 = por %p111, %p112
      %p114 = scmp.le.s32.totalorder 1, %s12
      %p115 = scmp.lt.s32.totalorder %s12, 3
      %p116 = pnand %p114, %p115
      %p117 = pneg %p116
      // Predicated region
      $region9: #{mlp_forward.1} parent=5 // pred_check
        _
      $region10: #{mlp_forward.1} parent=5 // pred_check_branch
        %119 = sbr.rel (%p116) target = $region12
      $region11: #{mlp_forward.1} parent=5 // pred_region
        %s120 = ssub.s32 %s12, 1
        // Predicated region
        $region13: #{mlp_forward.1} parent=11 // pred_check
          %p121 = pneg %p59
        $region14: #{mlp_forward.1} parent=11 // pred_check_branch
          %123 = sbr.rel (%p121) target = $region16
        $region15: #{mlp_forward.1} parent=11 // pred_region
          _
        $region16: #{mlp_forward.1} parent=11 // pred_fallthru
          _
        // Predicated region
        $region17: #{mlp_forward.1} parent=11 // pred_check
          %p124 = pneg %p80
        $region18: #{mlp_forward.1} parent=11 // pred_check_branch
          %126 = sbr.rel (%p124) target = $region20
        $region19: #{mlp_forward.1} parent=11 // pred_region
          _
        $region20: #{mlp_forward.1} parent=11 // pred_fallthru
          _
      $region12: #{mlp_forward.1} parent=5 // pred_fallthru
        _
      %p127 = scmp.lt.s32.totalorder %s12, 2
      // Predicated region
      $region21: #{mlp_forward.1} parent=5 // pred_check
        %p128 = pneg %p127
      $region22: #{mlp_forward.1} parent=5 // pred_check_branch
        %130 = sbr.rel (%p128) target = $region24
      $region23: #{mlp_forward.1} parent=5 // pred_region
        // Predicated region
        $region25: #{mlp_forward.1} parent=23 // pred_check
          %p131 = pneg %p32
        $region26: #{mlp_forward.1} parent=23 // pred_check_branch
          %133 = sbr.rel (%p131) target = $region28
        $region27: #{mlp_forward.1} parent=23 // pred_region
          %s134 = sand.u32 %s22, 1
          %s135 = sand.u32 %s22, 1
          %s136 = smul.addr %s135, 64
          %s137 = scalar_lea.vmem [#allocation2], %s136
          %s138 = smul.u32 4, %s12
          %s139 = smul.addr %s138, 4
          %s140 = scalar_lea.vmem %s0, %s139
          // Predicated region
          $region29: #{mlp_forward.1} parent=27 // pred_check
            _
          $region30: #{mlp_forward.1} parent=27 // pred_check_branch
            %142 = sbr.rel (0) target = $region32
          $region31: #{mlp_forward.1} parent=27 // pred_region
            // Predicated region
            $region33: #{mlp_forward.1} parent=31 // pred_check
              _
            $region34: #{mlp_forward.1} parent=31 // pred_check_branch
              %144 = sbr.rel (0) target = $region36
            $region35: #{mlp_forward.1} parent=31 // pred_region
              loop: start=0, step=1, limit=1
              $region37: #{mlp_forward.1} parent=35 // loop_pre_header
                _
              $region38: #{mlp_forward.1} parent=35 // loop_header
                %s146 = sphi 0, %s150
                %p147 = scmp.ge.s32.totalorder %s146, 1
                %s151 = sphi %s140, %s140
                %s152 = sphi %s137, %s137
              $region39: #{mlp_forward.1} parent=35 // loop_header_branch
                %149 = sbr.rel (%p147) target = $region43
              $region40: #{mlp_forward.1} parent=35 // loop_body
                %v153 = vld [vmem:[%s151] sm:$0xff]
                %154 = vst [vmem:[%s152] sm:$0xff] %v153
                %v155 = vld [vmem:[%s151 + $0x8] sm:$0xff]
                %156 = vst [vmem:[%s152 + $0x8] sm:$0xff] %v155
                %v157 = vld [vmem:[%s151 + $0x20] sm:$0xff]
                %158 = vst [vmem:[%s152 + $0x10] sm:$0xff] %v157
                %v159 = vld [vmem:[%s151 + $0x28] sm:$0xff]
                %160 = vst [vmem:[%s152 + $0x18] sm:$0xff] %v159
                %v161 = vld [vmem:[%s151 + $0x40] sm:$0xff]
                %162 = vst [vmem:[%s152 + $0x20] sm:$0xff] %v161
                %v163 = vld [vmem:[%s151 + $0x48] sm:$0xff]
                %164 = vst [vmem:[%s152 + $0x28] sm:$0xff] %v163
                %v165 = vld [vmem:[%s151 + $0x60] sm:$0xff]
                %166 = vst [vmem:[%s152 + $0x30] sm:$0xff] %v165
                %v167 = vld [vmem:[%s151 + $0x68] sm:$0xff]
                %168 = vst [vmem:[%s152 + $0x38] sm:$0xff] %v167
              $region41: #{mlp_forward.1} parent=35 // loop_footer
                %s150 = sadd.s32 1, %s146
              $region42: #{mlp_forward.1} parent=35 // loop_footer_branch
                %145 = sbr.rel target = $region38
              $region43: #{mlp_forward.1} parent=35 // loop_exit
                _
            $region36: #{mlp_forward.1} parent=31 // pred_fallthru
              _
            // Predicated region
            $region44: #{mlp_forward.1} parent=31 // pred_check
              _
            $region45: #{mlp_forward.1} parent=31 // pred_check_branch
              %170 = sbr.rel target = $region47
            $region46: #{mlp_forward.1} parent=31 // pred_region
              _
            $region47: #{mlp_forward.1} parent=31 // pred_fallthru
              _
          $region32: #{mlp_forward.1} parent=27 // pred_fallthru
            _
          %171 = vnop
        $region28: #{mlp_forward.1} parent=23 // pred_fallthru
          _
      $region24: #{mlp_forward.1} parent=5 // pred_fallthru
        _
      %p172 = scmp.le.s32.totalorder 1, %s12
      %p173 = scmp.lt.s32.totalorder %s12, 3
      %p174 = pnand %p172, %p173
      %p175 = pneg %p174
      // Predicated region
      $region48: #{mlp_forward.1} parent=5 // pred_check
        _
      $region49: #{mlp_forward.1} parent=5 // pred_check_branch
        %177 = sbr.rel (%p174) target = $region51
      $region50: #{mlp_forward.1} parent=5 // pred_region
        %s178 = ssub.s32 %s12, 1
        %s179 = sand.u32 %s25, 1
        %s180 = sand.u32 %s25, 1
        %s181 = smul.addr %s180, 64
        %s182 = scalar_lea.vmem [#allocation2], %s181
        // Predicated region
        $region52: #{mlp_forward.1} parent=50 // pred_check
          %p183 = pneg %p38
        $region53: #{mlp_forward.1} parent=50 // pred_check_branch
          %185 = sbr.rel (%p183) target = $region55
        $region54: #{mlp_forward.1} parent=50 // pred_region
          _
        $region55: #{mlp_forward.1} parent=50 // pred_fallthru
          _
        %s186 = sand.u32 %s25, 1
        %s187 = sand.u32 %s25, 1
        %s188 = smul.addr %s187, 64
        %s189 = scalar_lea.vmem [#allocation2], %s188
        %p190 = pneg %p38
        %p191 = pneg %p35
        %p192 = pneg %p59
        %p193 = pneg %p56
        %p194 = pneg %p80
        %p195 = pneg %p77
        %p196 = pneg %p106
        %p197 = pneg %p103
        %s198 = sand.u32 %s93, 1
        %s199 = scalar_lea.sflag [#allocation4], %s198
        %s200 = sand.u32 %s93, 1
        %s201 = smul.addr %s200, 4
        %s202 = scalar_lea.vmem [#allocation3], %s201
        %s203 = smul.u32 4, %s17
        %v205 = vld [vmem:[%s182] sm:$0xff]
        %v206 = vld [vmem:[%s182 + $0x8] sm:$0xff]
        %v207 = vld [vmem:[%s182 + $0x10] sm:$0xff]
        %v208 = vld [vmem:[%s182 + $0x18] sm:$0xff]
        %v209 = vld [vmem:[%s182 + $0x20] sm:$0xff]
        %v210 = vld [vmem:[%s182 + $0x28] sm:$0xff]
        %v211 = vld [vmem:[%s182 + $0x30] sm:$0xff]
        %v212 = vld [vmem:[%s182 + $0x38] sm:$0xff]
        %v213 = vld [vmem:[%s1] sm:$0xf]
        %v214 = vld [vmem:[%s1 + $0x4] sm:$0xf]
        %v215 = vld [vmem:[%s2] sm:$0xff]
        %v216 = vld [vmem:[%s2 + $0x8] sm:$0xff]
        %218 = vset.pattern.permute.xlu0 0
        %219 = vperm.xlu0 %218, %v215
        %v220 = vpop.permute.xlu0 %219
        %223 = vset.pattern.permute.xlu0 0
        %224 = vperm.xlu0 %223, %v216
        %v225 = vpop.permute.xlu0 %224
        %v229 = vunpack.c.l.b16 %v213
        %v230 = vunpack.c.l.b16 %v214
        %v231 = vpack.c.b16 %v230, %v229
        %v240 = vunpack.c.l.b16 %v205
        %v241 = vunpack.c.h.b16 %v205
        %v242 = vunpack.c.l.b16 %v206
        %v243 = vunpack.c.h.b16 %v206
        %v244 = vunpack.c.l.b16 %v207
        %v245 = vunpack.c.h.b16 %v207
        %v246 = vunpack.c.l.b16 %v208
        %v247 = vunpack.c.h.b16 %v208
        %v248 = vunpack.c.l.b16 %v209
        %v249 = vunpack.c.h.b16 %v209
        %v250 = vunpack.c.l.b16 %v210
        %v251 = vunpack.c.h.b16 %v210
        %v252 = vunpack.c.l.b16 %v211
        %v253 = vunpack.c.h.b16 %v211
        %v254 = vunpack.c.l.b16 %v212
        %v255 = vunpack.c.h.b16 %v212
        %v256 = vpack.c.b16 %v244, %v240
        %v257 = vpack.c.b16 %v245, %v241
        %v258 = vpack.c.b16 %v246, %v242
        %v259 = vpack.c.b16 %v247, %v243
        %v260 = vpack.c.b16 %v252, %v248
        %v261 = vpack.c.b16 %v253, %v249
        %v262 = vpack.c.b16 %v254, %v250
        %v263 = vpack.c.b16 %v255, %v251
        %vm272 = vcmask 261120
        %v274 = vsel %vm272, %v231, 0
        %276 = vmatpush.bf16.msra.mxu0 0
        %277 = vmatpush.bf16.msra.mxu0 0
        %278 = vmatpush.bf16.msra.mxu0 0
        %279 = vmatpush.bf16.msra.mxu0 0
        %280 = vmatpush.bf16.msra.mxu0 0
        %281 = vmatpush.bf16.msra.mxu0 0
        %282 = vmatpush.bf16.msra.mxu0 %v260
        %283 = vmatpush.bf16.msra.mxu0 %v256
        %284 = vmatmul.bf16.gmra.mxu0 %v274
        %v285 = vpop.f32.mrf.mxu0
        %v286 = vadd.f32 %v220, %v285
        %v287 = vpop.f32.mrf.mxu0
        %v288 = vadd.f32 %v225, %v287
        %289 = vdwg.mxu0
        %290 = vmatpush.bf16.msra.mxu0 0
        %291 = vmatpush.bf16.msra.mxu0 0
        %292 = vmatpush.bf16.msra.mxu0 0
        %293 = vmatpush.bf16.msra.mxu0 0
        %294 = vmatpush.bf16.msra.mxu0 0
        %295 = vmatpush.bf16.msra.mxu0 0
        %296 = vmatpush.bf16.msra.mxu0 %v261
        %297 = vmatpush.bf16.msra.mxu0 %v257
        %298 = vmatmul.bf16.gmra.mxu0 %v274
        %v299 = vpop.f32.mrf.mxu0
        %v300 = vadd.f32 %v220, %v299
        %v301 = vpop.f32.mrf.mxu0
        %v302 = vadd.f32 %v225, %v301
        %303 = vdwg.mxu0
        %304 = vmatpush.bf16.msra.mxu0 0
        %305 = vmatpush.bf16.msra.mxu0 0
        %306 = vmatpush.bf16.msra.mxu0 0
        %307 = vmatpush.bf16.msra.mxu0 0
        %308 = vmatpush.bf16.msra.mxu0 0
        %309 = vmatpush.bf16.msra.mxu0 0
        %310 = vmatpush.bf16.msra.mxu0 %v262
        %311 = vmatpush.bf16.msra.mxu0 %v258
        %312 = vmatmul.bf16.gmra.mxu0 %v274
        %v313 = vpop.f32.mrf.mxu0
        %v314 = vadd.f32 %v220, %v313
        %v315 = vpop.f32.mrf.mxu0
        %v316 = vadd.f32 %v225, %v315
        %317 = vdwg.mxu0
        %318 = vmatpush.bf16.msra.mxu0 0
        %319 = vmatpush.bf16.msra.mxu0 0
        %320 = vmatpush.bf16.msra.mxu0 0
        %321 = vmatpush.bf16.msra.mxu0 0
        %322 = vmatpush.bf16.msra.mxu0 0
        %323 = vmatpush.bf16.msra.mxu0 0
        %324 = vmatpush.bf16.msra.mxu0 %v263
        %325 = vmatpush.bf16.msra.mxu0 %v259
        %326 = vmatmul.bf16.gmra.mxu0 %v274
        %v327 = vpop.f32.mrf.mxu0
        %v328 = vadd.f32 %v220, %v327
        %v329 = vpop.f32.mrf.mxu0
        %v330 = vadd.f32 %v225, %v329
        %331 = vdwg.mxu0
        %v332 = vmax.f32 %v286, 0.0
        %v333 = vmax.f32 %v300, 0.0
        %v334 = vmax.f32 %v314, 0.0
        %v335 = vmax.f32 %v328, 0.0
        %v336 = vmax.f32 %v288, 0.0
        %v337 = vmax.f32 %v302, 0.0
        %v338 = vmax.f32 %v316, 0.0
        %v339 = vmax.f32 %v330, 0.0
        %v340 = vpack.c.bf16 %v336, %v332
        %v341 = vpack.c.bf16 %v337, %v333
        %v342 = vpack.c.bf16 %v338, %v334
        %v343 = vpack.c.bf16 %v339, %v335
        %v344 = vld [vmem:[%s1 + $0x8] sm:$0xf]
        %v345 = vld [vmem:[%s2] sm:$0xff]
        %347 = vset.pattern.permute.xlu0 1
        %348 = vperm.xlu0 %347, %v345
        %v349 = vpop.permute.xlu0 %348
        %vm351 = vcmask 130048
        %v353 = vsel %vm351, %v344, 0
        %355 = vmatpush.bf16.msra.mxu0 0
        %356 = vmatpush.bf16.msra.mxu0 0
        %357 = vmatpush.bf16.msra.mxu0 0
        %358 = vmatpush.bf16.msra.mxu0 0
        %359 = vmatpush.bf16.msra.mxu0 0
        %360 = vmatpush.bf16.msra.mxu0 0
        %361 = vmatpush.bf16.msra.mxu0 0
        %362 = vmatpush.bf16.msra.mxu0 %v340
        %363 = vmatmul.bf16.gmra.mxu0 %v353
        %v364 = vpop.f32.mrf.mxu0
        %v365 = vadd.f32 %v349, %v364
        %v366 = vpop.f32.mrf.mxu0
        %367 = vdwg.mxu0
        %368 = vmatpush.bf16.msra.mxu0 0
        %369 = vmatpush.bf16.msra.mxu0 0
        %370 = vmatpush.bf16.msra.mxu0 0
        %371 = vmatpush.bf16.msra.mxu0 0
        %372 = vmatpush.bf16.msra.mxu0 0
        %373 = vmatpush.bf16.msra.mxu0 0
        %374 = vmatpush.bf16.msra.mxu0 0
        %375 = vmatpush.bf16.msra.mxu0 %v341
        %376 = vmatmul.bf16.gmra.mxu0 %v353
        %v377 = vpop.f32.mrf.mxu0
        %v378 = vadd.f32 %v349, %v377
        %v379 = vpop.f32.mrf.mxu0
        %380 = vdwg.mxu0
        %381 = vmatpush.bf16.msra.mxu0 0
        %382 = vmatpush.bf16.msra.mxu0 0
        %383 = vmatpush.bf16.msra.mxu0 0
        %384 = vmatpush.bf16.msra.mxu0 0
        %385 = vmatpush.bf16.msra.mxu0 0
        %386 = vmatpush.bf16.msra.mxu0 0
        %387 = vmatpush.bf16.msra.mxu0 0
        %388 = vmatpush.bf16.msra.mxu0 %v342
        %389 = vmatmul.bf16.gmra.mxu0 %v353
        %v390 = vpop.f32.mrf.mxu0
        %v391 = vadd.f32 %v349, %v390
        %v392 = vpop.f32.mrf.mxu0
        %393 = vdwg.mxu0
        %394 = vmatpush.bf16.msra.mxu0 0
        %395 = vmatpush.bf16.msra.mxu0 0
        %396 = vmatpush.bf16.msra.mxu0 0
        %397 = vmatpush.bf16.msra.mxu0 0
        %398 = vmatpush.bf16.msra.mxu0 0
        %399 = vmatpush.bf16.msra.mxu0 0
        %400 = vmatpush.bf16.msra.mxu0 0
        %401 = vmatpush.bf16.msra.mxu0 %v343
        %402 = vmatmul.bf16.gmra.mxu0 %v353
        %v403 = vpop.f32.mrf.mxu0
        %v404 = vadd.f32 %v349, %v403
        %v405 = vpop.f32.mrf.mxu0
        %406 = vdwg.mxu0
        %v407 = vmax.f32 %v365, 0.0
        %v408 = vmax.f32 %v378, 0.0
        %v409 = vmax.f32 %v391, 0.0
        %v410 = vmax.f32 %v404, 0.0
        %v411 = vpack.c.bf16 %v408, %v407
        %v412 = vpack.c.bf16 %v410, %v409
        %v413 = vld [vmem:[%s2] sm:$0x1]
        %v414 = vunpack.c.l.bf16 %v411
        %v415 = vunpack.c.h.bf16 %v411
        %v416 = vunpack.c.l.bf16 %v412
        %v417 = vunpack.c.h.bf16 %v412
        %418 = vset.pattern.permute.xlu0 3
        %419 = vperm.xlu0 %418, %v345
        %v420 = vpop.permute.xlu0 %419
        %v422 = vmul.f32 %v414, %v420
        %v423 = vmul.f32 %v415, %v420
        %v424 = vmul.f32 %v416, %v420
        %v425 = vmul.f32 %v417, %v420
        %v426 = vrot.slane %v422, 4
        %v427 = vadd.f32 %v422, %v426
        %v428 = vrot.slane %v427, 2
        %v429 = vadd.f32 %v427, %v428
        %v430 = vrot.slane %v429, 1
        %v431 = vadd.f32 %v429, %v430
        %v432 = vrot.slane %v423, 4
        %v433 = vadd.f32 %v423, %v432
        %v434 = vrot.slane %v433, 2
        %v435 = vadd.f32 %v433, %v434
        %v436 = vrot.slane %v435, 1
        %v437 = vadd.f32 %v435, %v436
        %v438 = vrot.slane %v424, 4
        %v439 = vadd.f32 %v424, %v438
        %v440 = vrot.slane %v439, 2
        %v441 = vadd.f32 %v439, %v440
        %v442 = vrot.slane %v441, 1
        %v443 = vadd.f32 %v441, %v442
        %v444 = vrot.slane %v425, 4
        %v445 = vadd.f32 %v425, %v444
        %v446 = vrot.slane %v445, 2
        %v447 = vadd.f32 %v445, %v446
        %v448 = vrot.slane %v447, 1
        %v449 = vadd.f32 %v447, %v448
        %451 = vset.pattern.permute.xlu0 2
        %452 = vperm.xlu0 %451, %v413
        %v453 = vpop.permute.xlu0 %452
        %v455 = vadd.f32 %v431, %v453
        %v456 = vadd.f32 %v437, %v453
        %v457 = vadd.f32 %v443, %v453
        %v458 = vadd.f32 %v449, %v453
        %v463 = vrot.slane %v456, 7
        %v464 = vrot.slane %v457, 6
        %v465 = vrot.slane %v458, 5
        %vm466 = vcmask 1040384
        %v467 = vsel %vm466, %v455, %v463
        %vm468 = vcmask 1042434
        %v469 = vsel %vm468, %v464, %v465
        %vm470 = vcmask 1041408
        %v471 = vsel %vm470, %v467, %v469
        %v473 = vlaneseq
        %vm474 = vcmp.ge.s32.totalorder %v473, 0
        %vm475 = vcmp.lt.s32.totalorder %v473, 512
        %vm476 = vmand %vm474, %vm475
        %477 = vst.msk [vmem:[%s202] sm:$0xf] %vm476, %v471
        %s478 = sand.u32 %s93, 1
        %s479 = scalar_lea.sflag [#allocation4], %s478
        %s480 = sand.u32 %s93, 1
        %s481 = smul.addr %s480, 4
        %s482 = scalar_lea.vmem [#allocation3], %s481
        // Predicated region
        $region56: #{mlp_forward.1} parent=50 // pred_check
          %p483 = pneg %p103
        $region57: #{mlp_forward.1} parent=50 // pred_check_branch
          %485 = sbr.rel (%p483) target = $region59
        $region58: #{mlp_forward.1} parent=50 // pred_region
          %487 = vsyncadd %s479, 0
          %s488 = smul.addr %s17, 4
          %s489 = scalar_lea.hbm %s3, %s488
          %s491 = sshll.u32 %s482, 4
          %s492 = int_to_ptr.vmem [resolvable:$true] %s491
          %s493 = sshll.u32 %s489, 4
          %s494 = int_to_ptr.hbm [resolvable:$true] %s493
          %496 = dma.vmem_to_hbm [thread:$0]  %s492, 64, %s494, %s479
        $region59: #{mlp_forward.1} parent=50 // pred_fallthru
          _
      $region51: #{mlp_forward.1} parent=5 // pred_fallthru
        _
      %p497 = scmp.le.s32.totalorder 2, %s12
      // Predicated region
      $region60: #{mlp_forward.1} parent=5 // pred_check
        %p498 = pneg %p497
      $region61: #{mlp_forward.1} parent=5 // pred_check_branch
        %500 = sbr.rel (%p498) target = $region63
      $region62: #{mlp_forward.1} parent=5 // pred_region
        %s501 = ssub.s32 %s12, 2
        // Predicated region
        $region64: #{mlp_forward.1} parent=62 // pred_check
          %p502 = pneg %p109
        $region65: #{mlp_forward.1} parent=62 // pred_check_branch
          %504 = sbr.rel (%p502) target = $region67
        $region66: #{mlp_forward.1} parent=62 // pred_region
          %s505 = sand.u32 %s94, 1
          %s506 = scalar_lea.sflag [#allocation4], %s505
          %s507 = sand.u32 %s94, 1
          %s508 = smul.addr %s507, 4
          %s509 = scalar_lea.vmem [#allocation3], %s508
          %511 = dma.done %s506, 64
        $region67: #{mlp_forward.1} parent=62 // pred_fallthru
          _
      $region63: #{mlp_forward.1} parent=5 // pred_fallthru
        _
    $region6: #{mlp_forward.1} parent=1 // loop_footer
      %s16 = sadd.s32 1, %s12
    $region7: #{mlp_forward.1} parent=1 // loop_footer_branch
      %11 = sbr.rel target = $region3
    $region8: #{mlp_forward.1} parent=1 // loop_exit
      _
    %512 = vsyncpa [#allocation4], 1
    %s513 = scalar_lea.sflag [#allocation4], 1
    %514 = vsyncpa %s513, 1

</llo_original>
